<compile_context>
chip_gen: v7x
topology: tpu7x:2x2x1
jax: 0.10.0
libtpu: 0.0.40
codegen_flags: <defaults>
</compile_context>

<pallas_src>
import jax
import jax.numpy as jnp
from jax.experimental import pallas as pl
from jax.experimental.pallas import tpu as pltpu

BN_EPS = 1e-5
_VMEM_LIMIT = 32 * 1024 * 1024          # scoped VMEM limit (safe on v5e/v6e/v7x)
_VMEM_TILE_BUDGET = 20 * 1024 * 1024    # per-step working-set target for tile sizing


def _round_up(x, m):
    return (x + m - 1) // m * m


def _pick_tile(total_cols, target_cols):
    """Largest lane tile (multiple of 128) dividing `total_cols` (itself a
    multiple of 128) that is <= max(target_cols, 128)."""
    q = total_cols // 128
    target = max(target_cols // 128, 1)
    best, d = 1, 1
    while d * d <= q:
        if q % d == 0:
            for cand in (d, q // d):
                if cand <= target and cand > best:
                    best = cand
        d += 1
    return best * 128


def _stats_kernel(p_ref, w_ref, stats_ref):
    """Pass 1: per-channel (sum, sumsq) of the conv output for one M chunk
    ('parallel' axis 0), accumulated over the inner 'arbitrary' M-tile axis."""
    y = jnp.dot(w_ref[...], p_ref[...], preferred_element_type=jnp.float32)
    s = jnp.sum(y, axis=1, keepdims=True)           # (C_out, 1) lane reduce (XLU)
    ss = jnp.sum(y * y, axis=1, keepdims=True)      # (C_out, 1)
    tile = jnp.concatenate([s, ss], axis=1)         # (C_out, 2)

    @pl.when(pl.program_id(1) == 0)
    def _init():
        stats_ref[...] = jnp.zeros_like(stats_ref)

    stats_ref[...] += tile


def _norm_kernel(p_ref, w_ref, sc_ref, o_ref):
    """Pass 2: recompute the conv tile (K is tiny), apply the folded BN FMA +
    ReLU, store a lane-dense (C_out, tc) block of batch n directly in NCHW order."""
    y = jnp.dot(w_ref[...], p_ref[...], preferred_element_type=jnp.float32)
    scale = sc_ref[:, 0:1]
    shift = sc_ref[:, 1:2]
    o_ref[...] = jnp.maximum(y * scale + shift, 0.0).astype(o_ref.dtype)


def en_tcn_forward(x_nchw, conv_w, conv_b, gamma, beta, *,
                   tm=32768, stats_splits=2,
                   compute_dtype=jnp.bfloat16, out_dtype=jnp.float32):
    # Conv bias cancels exactly against the training-mode BN mean subtraction.
    del conv_b

    N, C_in, H, W = x_nchw.shape
    C_out = conv_w.shape[0]
    KW, stride, pad = 4, 2, 1
    W_out = (W + 2 * pad - KW) // stride + 1
    HW = H * W_out
    M = N * HW                          # true per-channel element count (BN divisor)
    K = KW * C_in
    K_p = _round_up(K, 16)
    HWp = _round_up(HW, 128)            # per-batch padded column count (lane axis)
    M_fused = N * HWp
    itemsize = jnp.dtype(compute_dtype).itemsize

    # ---- glue: bf16-first im2col slab (K_p, N*HWp); rows ordered tap*C_in + ci,
    # columns ordered (n, h, w_out).  Stride 2 / kernel 4 means 2x element
    # duplication, but in bf16 the slab is ~1x the bytes of f32 x.
    # TODO(synk): build the 4 taps in-kernel from a pl.ANY HBM ref (shifted
    # stride-2 lane slices feeding accumulating dots) to drop this slab entirely.
    x_c = x_nchw.astype(compute_dtype)
    xp = jnp.transpose(x_c, (1, 0, 2, 3))                        # (C_in, N, H, W)
    xp = jnp.pad(xp, ((0, 0), (0, 0), (0, 0), (pad, pad)))       # (C_in, N, H, W+2)
    taps = [xp[..., k:k + stride * W_out:stride] for k in range(KW)]
    p3 = jnp.stack(taps, axis=0).reshape(K, N, HW)
    p3 = jnp.pad(p3, ((0, K_p - K), (0, 0), (0, HWp - HW)))      # zero pad -> 0 in sums
    patches = p3.reshape(K_p, M_fused)                           # free reshape

    # PyTorch weight (C_out, C_in, 1, KW) -> (C_out, K_p), columns tap*C_in + ci.
    w_t = jnp.transpose(conv_w[:, :, 0, :], (0, 2, 1)).reshape(C_out, K)
    w_t = jnp.pad(w_t, ((0, 0), (0, K_p - K))).astype(compute_dtype)

    # ---- pass 1: per-channel statistics.  'parallel' chunk axis (v7x megacore)
    # x 'arbitrary' M-tile axis; tiles sized for ~1 MiB+/step within the budget.
    nc = stats_splits if (M_fused // 128) % stats_splits == 0 else 1
    chunk = M_fused // nc
    bytes_per_col1 = 2 * K_p * itemsize + 2 * 4 * C_out          # dbl-buf in + y/y^2
    tm1 = _pick_tile(chunk, min(tm, _VMEM_TILE_BUDGET // bytes_per_col1))
    mt1 = chunk // tm1

    stats_partial = pl.pallas_call(
        _stats_kernel,
        out_shape=jax.ShapeDtypeStruct((nc * C_out, 2), jnp.float32),
        grid=(nc, mt1),
        in_specs=[pl.BlockSpec((K_p, tm1), lambda c, i: (0, c * mt1 + i)),
                  pl.BlockSpec((C_out, K_p), lambda c, i: (0, 0))],
        out_specs=pl.BlockSpec((C_out, 2), lambda c, i: (c, 0)),
        compiler_params=pltpu.CompilerParams(
            dimension_semantics=("parallel", "arbitrary"),
            vmem_limit_bytes=_VMEM_LIMIT),
    )(patches, w_t)

    # Tiny finalize on C_out channels: merge chunk partials, fold BN into a single
    # per-channel (scale, shift) FMA.  Zero-padded columns contributed exactly 0.
    totals = stats_partial.reshape(nc, C_out, 2).sum(axis=0)
    mean = totals[:, 0] / M
    var = jnp.maximum(totals[:, 1] / M - mean * mean, 0.0)
    scale = gamma.astype(jnp.float32) * jax.lax.rsqrt(var + BN_EPS)
    shift = beta.astype(jnp.float32) - mean * scale
    scale_shift = jnp.stack([scale, shift], axis=1)              # (C_out, 2)

    # ---- pass 2: normalize + ReLU, storing directly into (N, C_out, HWp)
    # (NCHW-compatible -> free reshape at the end, no epilogue transpose).
    # Column tiles are >=128-wide (lane-dense, unmasked stores); per-step payload
    # is capped by one batch row (tc <= HWp), the cost of writing NCHW directly.
    bytes_per_col2 = 2 * K_p * itemsize + 2 * 4 * C_out + 4 * C_out
    tc = _pick_tile(HWp, min(tm, _VMEM_TILE_BUDGET // bytes_per_col2))
    gc = HWp // tc

    out3 = pl.pallas_call(
        _norm_kernel,
        out_shape=jax.ShapeDtypeStruct((N, C_out, HWp), out_dtype),
        grid=(N, gc),
        in_specs=[pl.BlockSpec((K_p, tc), lambda n, j: (0, n * gc + j)),
                  pl.BlockSpec((C_out, K_p), lambda n, j: (0, 0)),
                  pl.BlockSpec((C_out, 2), lambda n, j: (0, 0))],
        out_specs=pl.BlockSpec((None, C_out, tc), lambda n, j: (n, 0, j)),
        compiler_params=pltpu.CompilerParams(
            dimension_semantics=("parallel", "parallel"),
            vmem_limit_bytes=_VMEM_LIMIT),
    )(patches, w_t, scale_shift)

    if HWp != HW:
        out3 = out3[:, :, :HW]
    return out3.reshape(N, C_out, H, W_out)                      # NCHW, no transpose


def reference(x, conv_w, conv_b, gamma, beta):
    y = jax.lax.conv_general_dilated(
        x, conv_w, window_strides=(1, 2), padding=((0, 0), (1, 1)),
        dimension_numbers=("NCHW", "OIHW", "NCHW"))
    y = y + conv_b.reshape(1, -1, 1, 1)
    mean = jnp.mean(y, axis=(0, 2, 3), keepdims=True)
    var = jnp.mean((y - mean) ** 2, axis=(0, 2, 3), keepdims=True)
    y = (y - mean) / jnp.sqrt(var + BN_EPS)
    y = y * gamma.reshape(1, -1, 1, 1) + beta.reshape(1, -1, 1, 1)
    return jnp.maximum(y, 0.0)


if __name__ == "__main__":
    N, C_in, C_out, H, W = 2, 4, 8, 16, 16

    key = jax.random.PRNGKey(0)
    kx, kw, kb, kg, kbeta = jax.random.split(key, 5)
    x = jax.random.normal(kx, (N, C_in, H, W), dtype=jnp.float32)
    conv_w = 0.1 * jax.random.normal(kw, (C_out, C_in, 1, 4), dtype=jnp.float32)
    conv_b = 0.1 * jax.random.normal(kb, (C_out,), dtype=jnp.float32)
    gamma = 1.0 + 0.1 * jax.random.normal(kg, (C_out,), dtype=jnp.float32)
    beta = 0.1 * jax.random.normal(kbeta, (C_out,), dtype=jnp.float32)

    ref = reference(x, conv_w, conv_b, gamma, beta)

    # f32 compute, single stats chunk with tm=128 -> forces a multi-step grid so
    # cross-tile stat accumulation is exercised.  Tight tolerance.
    out_f32 = jax.block_until_ready(
        en_tcn_forward(x, conv_w, conv_b, gamma, beta,
                       tm=128, stats_splits=1, compute_dtype=jnp.float32))
    assert out_f32.shape == (N, C_out, H, W // 2), out_f32.shape
    assert jnp.allclose(out_f32, ref, atol=1e-4, rtol=1e-4)

    # f32 compute, default configuration (large tiles, 2-way parallel stats chunks).
    out_f32b = jax.block_until_ready(
        en_tcn_forward(x, conv_w, conv_b, gamma, beta, compute_dtype=jnp.float32))
    assert jnp.allclose(out_f32b, ref, atol=1e-4, rtol=1e-4)

    # bf16 matmul operands (performance default): loose tolerance vs f32 reference.
    out_bf16 = jax.block_until_ready(
        en_tcn_forward(x, conv_w, conv_b, gamma, beta))
    assert out_bf16.shape == (N, C_out, H, W // 2), out_bf16.shape
    assert jnp.allclose(out_bf16, ref, atol=3e-2, rtol=3e-2)

    print("KERNEL_OK")
</pallas_src>

<mosaic_0001>
module attributes {stable_mosaic.version = 11 : i64} {
  func.func @_stats_kernel(%arg0: i32, %arg1: i32, %arg2: memref<16x128xf32, #tpu.memory_space<vmem>>, %arg3: memref<8x16xf32, #tpu.memory_space<vmem>>, %arg4: memref<8x2xf32, #tpu.memory_space<vmem>>) attributes {dimension_semantics = [#tpu.dimension_semantics<parallel>, #tpu.dimension_semantics<arbitrary>], iteration_bounds = array<i64: 1, 2>, scalar_prefetch = 0 : i64, scratch_operands = 0 : i64, tpu.core_type = #tpu.core_type<tc>, window_params = [{transform_indices = @transform_0, window_bounds = array<i64: 16, 128>}, {pipeline_mode = #tpu.pipeline_mode<synchronous>, transform_indices = @transform_1, window_bounds = array<i64: 8, 16>}, {transform_indices = @transform_2, window_bounds = array<i64: 8, 2>}]} {
    %c0 = arith.constant 0 : index
    %c0_0 = arith.constant 0 : index
    %0 = vector.load %arg3[%c0, %c0_0] : memref<8x16xf32, #tpu.memory_space<vmem>>, vector<8x16xf32>
    %c0_1 = arith.constant 0 : index
    %c0_2 = arith.constant 0 : index
    %1 = vector.load %arg2[%c0_1, %c0_2] : memref<16x128xf32, #tpu.memory_space<vmem>>, vector<16x128xf32>
    %cst = arith.constant dense<0.000000e+00> : vector<8x128xf32>
    %2 = tpu.matmul %0, %1, %cst {dimension_numbers = #tpu.dot_dimension_numbers<[1], [0], [0], [1], [0, 0, 1, 1], [], []>} : vector<8x16xf32>, vector<16x128xf32>, vector<8x128xf32> -> vector<8x128xf32>
    %cst_3 = arith.constant dense<0.000000e+00> : vector<8xf32>
    %3 = vector.multi_reduction <add>, %2, %cst_3 [1] : vector<8x128xf32> to vector<8xf32>
    %4 = vector.shape_cast %3 : vector<8xf32> to vector<8x1xf32>
    %5 = arith.mulf %2, %2 : vector<8x128xf32>
    %cst_4 = arith.constant dense<0.000000e+00> : vector<8xf32>
    %6 = vector.multi_reduction <add>, %5, %cst_4 [1] : vector<8x128xf32> to vector<8xf32>
    %7 = vector.shape_cast %6 : vector<8xf32> to vector<8x1xf32>
    %8 = tpu.concatenate %4, %7 in 1 : vector<8x1xf32>, vector<8x1xf32> -> vector<8x2xf32>
    %c0_i32 = arith.constant 0 : i32
    %9 = arith.cmpi eq, %arg1, %c0_i32 : i32
    %10 = arith.extui %9 : i1 to i32
    %c0_i32_5 = arith.constant 0 : i32
    %11 = arith.cmpi ne, %10, %c0_i32_5 : i32
    scf.if %11 {
      %cst_10 = arith.constant 0.000000e+00 : f32
      %15 = vector.broadcast %cst_10 : f32 to vector<8x2xf32>
      %c0_11 = arith.constant 0 : index
      %c0_12 = arith.constant 0 : index
      %16 = vector.load %arg4[%c0_11, %c0_12] : memref<8x2xf32, #tpu.memory_space<vmem>>, vector<8x2xf32>
      tpu.vector_store %arg4[%c0_11, %c0_12], %15 {strides = array<i32>} : memref<8x2xf32, #tpu.memory_space<vmem>>, vector<8x2xf32>,
    } else {
    }
    %c0_6 = arith.constant 0 : index
    %c0_7 = arith.constant 0 : index
    %12 = vector.load %arg4[%c0_6, %c0_7] : memref<8x2xf32, #tpu.memory_space<vmem>>, vector<8x2xf32>
    %13 = arith.addf %12, %8 : vector<8x2xf32>
    %c0_8 = arith.constant 0 : index
    %c0_9 = arith.constant 0 : index
    %14 = vector.load %arg4[%c0_8, %c0_9] : memref<8x2xf32, #tpu.memory_space<vmem>>, vector<8x2xf32>
    tpu.vector_store %arg4[%c0_8, %c0_9], %13 {strides = array<i32>} : memref<8x2xf32, #tpu.memory_space<vmem>>, vector<8x2xf32>,
    return
  }
  func.func @transform_0(%arg0: i32, %arg1: i32) -> (i32, i32) {
    %c2_i32 = arith.constant 2 : i32
    %0 = arith.muli %arg0, %c2_i32 : i32
    %1 = arith.addi %0, %arg1 : i32
    %c0_i32 = arith.constant 0 : i32
    %c0_i32_0 = arith.constant 0 : i32
    return %c0_i32, %1 : i32, i32
  }
  func.func @transform_1(%arg0: i32, %arg1: i32) -> (i32, i32) {
    %c0_i32 = arith.constant 0 : i32
    %c0_i32_0 = arith.constant 0 : i32
    %c0_i32_1 = arith.constant 0 : i32
    return %c0_i32, %c0_i32_0 : i32, i32
  }
  func.func @transform_2(%arg0: i32, %arg1: i32) -> (i32, i32) {
    %c0_i32 = arith.constant 0 : i32
    %c0_i32_0 = arith.constant 0 : i32
    return %arg0, %c0_i32 : i32, i32
  }
}

</mosaic_0001>

<llo_original>
// kernel: tpu_custom_call.1
$region0: #{tpu_custom_call.1}
  #allocation0 [shape = 'u32[]', space=smem, size = 0x4, offset = 0x4, fixed_abs, tag = 'smem constant byte address 0x4 - core index']
  #allocation1 [shape = 'u32[144,128]{1,0:T(1,128)}', space=vmem, size = 0x12000, scoped, tag = 'internal scratch']
  %s0 = inlined_call_operand.hbm [shape: f32[16,256], index: 0, kind: input, shape index: {}]
  %s1 = inlined_call_operand.hbm [shape: f32[8,16], index: 1, kind: input, shape index: {}]
  %s2 = inlined_call_operand.vmem [shape: f32[8,2], index: 2, kind: output, shape index: {}]
  %s3 = sld [smem:[#allocation0]]
  $region53: #{tpu_custom_call.1} parent=0
    _
  %s5 = ssub.s32 1, %s3
  %s6 = scalar_select 0, %s5, %s3
  $region1: #{tpu_custom_call.1} parent=0
    #allocation2 [shape = 'u8[16384]{0}', space=vmem, size = 0x4000, scoped, tag = 'input window, operand 0']
    #allocation3 [shape = 's32[2]{0}', space=sflag, size = 0x8, scoped, tag = 'scoped memory for tpu_custom_call.1']
    #allocation4 [shape = 'u8[4096]{0}', space=vmem, size = 0x1000, scoped, tag = 'input window, operand 1, single buffered']
    #allocation5 [shape = 's32[1]{0}', space=sflag, size = 0x4, scoped, tag = 'scoped memory for tpu_custom_call.1']
    %7 = vsyncpa [#allocation3], 0
    %s8 = scalar_lea.sflag [#allocation3], 1
    %9 = vsyncpa %s8, 0
    %10 = vsyncpa [#allocation5], 0
    loop: start=0, step=1, limit=4
    $region2: #{tpu_custom_call.1} parent=1 // loop_pre_header
      _
    $region3: #{tpu_custom_call.1} parent=1 // loop_header
      %s12 = sphi 0, %s16
      %p13 = scmp.ge.s32.totalorder %s12, 4
      %s19 = sphi 0, %s31
      %s20 = sphi 0, %s27
      %s21 = sphi 0, %s19
      %s22 = sphi 0, %s20
      %s23 = sphi 0, %s21
      %s24 = sphi 0, %s22
      %s38 = sphi 0, %s40
      %s41 = sphi 0, %s38
      %s42 = sphi 0, %s41
      %s58 = sphi 0, %s42
      %s62 = sphi 0, %s62
      %s64 = sphi 0, %s62
      %s65 = sphi 0, %s64
      %s79 = sphi 0, %s65
      %s85 = sphi 0, %s87
      %s88 = sphi 0, %s85
      %s89 = sphi 0, %s88
      %s105 = sphi 0, %s89
    $region4: #{tpu_custom_call.1} parent=1 // loop_header_branch
      %15 = sbr.rel (%p13) target = $region8
    $region5: #{tpu_custom_call.1} parent=1 // loop_body
      %s17 = ssub.s32 %s12, 1
      %s18 = ssub.s32 %s12, 2
      %s25 = sadd.s32 1, %s20
      %p26 = scmp.ge.s32.totalorder %s25, 2
      %s27 = scalar_select %p26, 0, %s25
      %s28 = sadd.s32 1, %s19
      %s29 = scalar_select %p26, %s28, %s19
      %p30 = scmp.ge.s32.totalorder %s29, 1
      %s31 = scalar_select %p30, 0, %s29
      %s32 = smul.u32 %s19, 2
      %s33 = sadd.s32 %s32, %s20
      %s34 = smul.u32 %s31, 2
      %s35 = sadd.s32 %s34, %s27
      %s36 = ssub.s32 %s33, %s35
      %p37 = scmp.eq.s32.totalorder %s36, 0
      %s39 = sadd.s32 %s38, 1
      %s40 = scalar_select %p37, %s38, %s39
      %p43 = pneg %p37
      %p44 = scmp.eq.s32.totalorder %s12, 1
      %p45 = por %p43, %p44
      %p46 = scmp.ne.s32.totalorder %s38, %s41
      %p47 = scmp.eq.s32.totalorder %s12, 0
      %p48 = por %p46, %p47
      %p49 = scmp.ne.s32.totalorder %s38, %s41
      %p50 = scmp.eq.s32.totalorder %s17, 1
      %p51 = por %p49, %p50
      %p52 = scmp.ne.s32.totalorder %s41, %s42
      %p53 = scmp.eq.s32.totalorder %s17, 0
      %p54 = por %p52, %p53
      %p55 = scmp.ne.s32.totalorder %s41, %s42
      %p56 = scmp.eq.s32.totalorder %s18, 1
      %p57 = por %p55, %p56
      %p59 = scmp.ne.s32.totalorder %s42, %s58
      %p60 = scmp.eq.s32.totalorder %s18, 0
      %p61 = por %p59, %p60
      %s63 = sadd.s32 %s62, 1
      %p66 = scmp.eq.s32.totalorder %s12, 1
      %p67 = scmp.ne.s32.totalorder %s62, %s64
      %p68 = scmp.eq.s32.totalorder %s12, 0
      %p69 = por %p67, %p68
      %p70 = scmp.ne.s32.totalorder %s62, %s64
      %p71 = scmp.eq.s32.totalorder %s17, 1
      %p72 = por %p70, %p71
      %p73 = scmp.ne.s32.totalorder %s64, %s65
      %p74 = scmp.eq.s32.totalorder %s17, 0
      %p75 = por %p73, %p74
      %p76 = scmp.ne.s32.totalorder %s64, %s65
      %p77 = scmp.eq.s32.totalorder %s18, 1
      %p78 = por %p76, %p77
      %p80 = scmp.ne.s32.totalorder %s65, %s79
      %p81 = scmp.eq.s32.totalorder %s18, 0
      %p82 = por %p80, %p81
      %s83 = ssub.s32 %s19, %s31
      %p84 = scmp.eq.s32.totalorder %s83, 0
      %s86 = sadd.s32 %s85, 1
      %s87 = scalar_select %p84, %s85, %s86
      %p90 = pneg %p84
      %p91 = scmp.eq.s32.totalorder %s12, 1
      %p92 = por %p90, %p91
      %p93 = scmp.ne.s32.totalorder %s85, %s88
      %p94 = scmp.eq.s32.totalorder %s12, 0
      %p95 = por %p93, %p94
      %p96 = scmp.ne.s32.totalorder %s85, %s88
      %p97 = scmp.eq.s32.totalorder %s17, 1
      %p98 = por %p96, %p97
      %p99 = scmp.ne.s32.totalorder %s88, %s89
      %p100 = scmp.eq.s32.totalorder %s17, 0
      %p101 = por %p99, %p100
      %p102 = scmp.ne.s32.totalorder %s88, %s89
      %p103 = scmp.eq.s32.totalorder %s18, 1
      %p104 = por %p102, %p103
      %p106 = scmp.ne.s32.totalorder %s89, %s105
      %p107 = scmp.eq.s32.totalorder %s18, 0
      %p108 = por %p106, %p107
      %p109 = scmp.le.s32.totalorder 1, %s12
      %p110 = scmp.lt.s32.totalorder %s12, 3
      %p111 = pnand %p109, %p110
      %p112 = pneg %p111
      // Predicated region
      $region9: #{tpu_custom_call.1} parent=5 // pred_check
        _
      $region10: #{tpu_custom_call.1} parent=5 // pred_check_branch
        %114 = sbr.rel (%p111) target = $region12
      $region11: #{tpu_custom_call.1} parent=5 // pred_region
        %s115 = ssub.s32 %s12, 1
        // Predicated region
        $region13: #{tpu_custom_call.1} parent=11 // pred_check
          %p116 = pneg %p75
        $region14: #{tpu_custom_call.1} parent=11 // pred_check_branch
          %118 = sbr.rel (%p116) target = $region16
        $region15: #{tpu_custom_call.1} parent=11 // pred_region
          %s120 = ssub.s32 128, 128
          %121 = vsyncadd [#allocation5], %s120
          %s123 = sshll.u32 [#allocation4], 4
          %s124 = int_to_ptr.vmem [resolvable:$true] %s123
          %126 = dma.hbm_to_vmem [thread:$0]  %s1, 128, %s124, [#allocation5]
        $region16: #{tpu_custom_call.1} parent=11 // pred_fallthru
          _
      $region12: #{tpu_custom_call.1} parent=5 // pred_fallthru
        _
      %p127 = scmp.lt.s32.totalorder %s12, 2
      // Predicated region
      $region17: #{tpu_custom_call.1} parent=5 // pred_check
        %p128 = pneg %p127
      $region18: #{tpu_custom_call.1} parent=5 // pred_check_branch
        %130 = sbr.rel (%p128) target = $region20
      $region19: #{tpu_custom_call.1} parent=5 // pred_region
        // Predicated region
        $region21: #{tpu_custom_call.1} parent=19 // pred_check
          %p131 = pneg %p48
        $region22: #{tpu_custom_call.1} parent=19 // pred_check_branch
          %133 = sbr.rel (%p131) target = $region24
        $region23: #{tpu_custom_call.1} parent=19 // pred_region
          %s134 = sand.u32 %s38, 1
          %s135 = scalar_lea.sflag [#allocation3], %s134
          %s136 = sand.u32 %s38, 1
          %s137 = smul.addr %s136, 16
          %s138 = scalar_lea.vmem [#allocation2], %s137
          %s139 = smul.u32 %s19, 2
          %s140 = sadd.s32 %s139, %s20
          %s142 = ssub.s32 256, 256
          %143 = vsyncadd %s135, %s142
          %s144 = smul.addr %s140, 128
          %s145 = scalar_lea.hbm %s0, %s144
          %s146 = sshll.u32 %s138, 4
          %s147 = int_to_ptr.vmem [resolvable:$true] %s146
          %152 = dma.hbm_to_vmem [thread:$0]  %s145, 256, %s147, %s135, 256, 128, 8
        $region24: #{tpu_custom_call.1} parent=19 // pred_fallthru
          _
      $region20: #{tpu_custom_call.1} parent=5 // pred_fallthru
        _
      %p153 = scmp.le.s32.totalorder 1, %s12
      %p154 = scmp.lt.s32.totalorder %s12, 3
      %p155 = pnand %p153, %p154
      %p156 = pneg %p155
      // Predicated region
      $region25: #{tpu_custom_call.1} parent=5 // pred_check
        _
      $region26: #{tpu_custom_call.1} parent=5 // pred_check_branch
        %158 = sbr.rel (%p155) target = $region28
      $region27: #{tpu_custom_call.1} parent=5 // pred_region
        %s159 = ssub.s32 %s12, 1
        %s160 = sand.u32 %s41, 1
        %s161 = scalar_lea.sflag [#allocation3], %s160
        %s162 = sand.u32 %s41, 1
        %s163 = smul.addr %s162, 16
        %s164 = scalar_lea.vmem [#allocation2], %s163
        // Predicated region
        $region29: #{tpu_custom_call.1} parent=27 // pred_check
          %p165 = pneg %p54
        $region30: #{tpu_custom_call.1} parent=27 // pred_check_branch
          %167 = sbr.rel (%p165) target = $region32
        $region31: #{tpu_custom_call.1} parent=27 // pred_region
          %168 = dma.done %s161, 256
        $region32: #{tpu_custom_call.1} parent=27 // pred_fallthru
          _
        // Predicated region
        $region33: #{tpu_custom_call.1} parent=27 // pred_check
          %p169 = pneg %p75
        $region34: #{tpu_custom_call.1} parent=27 // pred_check_branch
          %171 = sbr.rel (%p169) target = $region36
        $region35: #{tpu_custom_call.1} parent=27 // pred_region
          %172 = dma.done [#allocation5], 128
        $region36: #{tpu_custom_call.1} parent=27 // pred_fallthru
          _
        %s173 = sand.u32 %s41, 1
        %s174 = scalar_lea.sflag [#allocation3], %s173
        %s175 = sand.u32 %s41, 1
        %s176 = smul.addr %s175, 16
        %s177 = scalar_lea.vmem [#allocation2], %s176
        %p178 = pneg %p54
        %p179 = pneg %p51
        %p180 = pneg %p75
        %p181 = pneg %p72
        %p182 = pneg %p101
        %p183 = pneg %p98
        %p184 = scmp.lt.s32.totalorder %s21, 0
        %s185 = scalar_select %p184, %s21, 0
        %s186 = smul.addr %s185, 8
        %s187 = scalar_lea.vmem %s2, %s186
        %s188 = smul.u32 %s21, 2
        %s189 = sadd.s32 %s188, %s22
        %p190 = scmp.lt.s32.totalorder %s21, 0
        %s191 = scalar_select %p190, %s21, 0
        %s192 = smul.addr %s191, 8
        %s193 = scalar_lea.vmem %s2, %s192
        %v194 = vld [vmem:[#allocation4] sm:$0xff]
        %v195 = vld [vmem:[%s164] sm:$0xff]
        %v196 = vld [vmem:[%s164 + $0x8] sm:$0xff]
        %vm197 = vcmask 130048
        %v199 = vsel %vm197, %v194, 0
        %201 = vmatprep.subr.mxu0 0.0
        %202 = vmatpush1.msra.mxu0 %v195
        %203 = vmatprep.subr.mxu0 0.0
        %204 = vmatpush1.msra.mxu0 %v196
        %205 = vmatprep.subr.mxu0 0.0
        %206 = vmatpush1.msra.mxu0 0.0
        %207 = vmatprep.subr.mxu0 0.0
        %208 = vmatpush1.msra.mxu0 0.0
        %209 = vmatprep.subr.mxu0 0.0
        %210 = vmatpush1.msra.mxu0 0.0
        %211 = vmatprep.subr.mxu0 0.0
        %212 = vmatpush1.msra.mxu0 0.0
        %213 = vmatprep.subr.mxu0 0.0
        %214 = vmatpush1.msra.mxu0 0.0
        %215 = vmatprep.subr.mxu0 0.0
        %216 = vmatpush1.msra.mxu0 0.0
        %217 = vmatprep.subr.mxu0 0.0
        %218 = vmatpush1.msra.mxu0 0.0
        %219 = vmatprep.subr.mxu0 0.0
        %220 = vmatpush1.msra.mxu0 0.0
        %221 = vmatprep.subr.mxu0 0.0
        %222 = vmatpush1.msra.mxu0 0.0
        %223 = vmatprep.subr.mxu0 0.0
        %224 = vmatpush1.msra.mxu0 0.0
        %225 = vmatprep.subr.mxu0 0.0
        %226 = vmatpush1.msra.mxu0 0.0
        %227 = vmatprep.subr.mxu0 0.0
        %228 = vmatpush1.msra.mxu0 0.0
        %229 = vmatprep.subr.mxu0 0.0
        %230 = vmatpush1.msra.mxu0 0.0
        %231 = vmatprep.subr.mxu0 0.0
        %232 = vmatpush1.msra.mxu0 0.0
        %233 = vmatprep.subr.mxu0 0.0
        %234 = vmatpush1.msra.mxu0 0.0
        %235 = vmatprep.subr.mxu0 0.0
        %236 = vmatpush1.msra.mxu0 0.0
        %237 = vmatprep.subr.mxu0 0.0
        %238 = vmatpush1.msra.mxu0 0.0
        %239 = vmatprep.subr.mxu0 0.0
        %240 = vmatpush1.msra.mxu0 0.0
        %241 = vmatprep.subr.mxu0 0.0
        %242 = vmatpush1.msra.mxu0 0.0
        %243 = vmatprep.subr.mxu0 0.0
        %244 = vmatpush1.msra.mxu0 0.0
        %245 = vmatprep.subr.mxu0 0.0
        %246 = vmatpush1.msra.mxu0 0.0
        %247 = vmatprep.subr.mxu0 0.0
        %248 = vmatpush1.msra.mxu0 0.0
        %249 = vmatprep.subr.mxu0 0.0
        %250 = vmatpush1.msra.mxu0 0.0
        %251 = vmatprep.subr.mxu0 0.0
        %252 = vmatpush1.msra.mxu0 0.0
        %253 = vmatprep.subr.mxu0 0.0
        %254 = vmatpush1.msra.mxu0 0.0
        %255 = vmatprep.subr.mxu0 0.0
        %256 = vmatpush1.msra.mxu0 0.0
        %257 = vmatprep.subr.mxu0 0.0
        %258 = vmatpush1.msra.mxu0 0.0
        %259 = vmatprep.subr.mxu0 0.0
        %260 = vmatpush1.msra.mxu0 0.0
        %261 = vmatprep.subr.mxu0 0.0
        %262 = vmatpush1.msra.mxu0 0.0
        %263 = vmatprep.subr.mxu0 0.0
        %264 = vmatpush1.msra.mxu0 0.0
        %265 = vmatprep.mubr.f32.mxu0 0.0
        %266 = vmatmul.mubr.f32.gmra.mrb[0].mxu0 %v199
        %v267 = vpop.f32.mrb[0].mxu0
        %v268 = vadd.f32 0.0, %v267
        %v269 = vpop.f32.mrb[0].mxu0
        %270 = vdwg.mxu0
        %271 = vadd.xlane.f32.xlu0 %v268
        %v272 = vpop.xlane.xlu0 %271
        %v273 = vmul.f32 %v268, %v268
        %274 = vadd.xlane.f32.xlu0 %v273
        %v275 = vpop.xlane.xlu0 %274
        %vm276 = vcmask 7168
        %v277 = vsel %vm276, %v272, %v275
        %p278 = scmp.eq.s32.totalorder %s22, 0
        // Predicated region
        $region37: #{tpu_custom_call.1} parent=27 // pred_check
          %p279 = pneg %p278
        $region38: #{tpu_custom_call.1} parent=27 // pred_check_branch
          %281 = sbr.rel (%p279) target = $region40
        $region39: #{tpu_custom_call.1} parent=27 // pred_region
          %vm282 = vcmask 15360
          %283 = vst.msk [vmem:[%s193] sm:$0xff] %vm282, 0.0
        $region40: #{tpu_custom_call.1} parent=27 // pred_fallthru
          _
        %v284 = vld [vmem:[%s193] sm:$0xff]
        %v285 = vadd.f32 %v284, %v277
        %vm286 = vcmask 15360
        %287 = vst.msk [vmem:[%s193] sm:$0xff] %vm286, %v285
        %p288 = scmp.lt.s32.totalorder %s21, 0
        %s289 = scalar_select %p288, %s21, 0
        %s290 = smul.addr %s289, 8
        %s291 = scalar_lea.vmem %s2, %s290
        // Predicated region
        $region41: #{tpu_custom_call.1} parent=27 // pred_check
          %p292 = pneg %p98
        $region42: #{tpu_custom_call.1} parent=27 // pred_check_branch
          %294 = sbr.rel (%p292) target = $region44
        $region43: #{tpu_custom_call.1} parent=27 // pred_region
          _
        $region44: #{tpu_custom_call.1} parent=27 // pred_fallthru
          _
        // Predicated region
        $region45: #{tpu_custom_call.1} parent=27 // pred_check
          %p295 = pneg %p98
        $region46: #{tpu_custom_call.1} parent=27 // pred_check_branch
          %297 = sbr.rel (%p295) target = $region48
        $region47: #{tpu_custom_call.1} parent=27 // pred_region
          %p298 = scmp.lt.s32.totalorder %s21, 0
          %s299 = scalar_select %p298, %s21, 0
          %s300 = smul.addr %s299, 8
          %s301 = scalar_lea.vmem %s2, %s300
        $region48: #{tpu_custom_call.1} parent=27 // pred_fallthru
          _
      $region28: #{tpu_custom_call.1} parent=5 // pred_fallthru
        _
      %p302 = scmp.le.s32.totalorder 2, %s12
      // Predicated region
      $region49: #{tpu_custom_call.1} parent=5 // pred_check
        %p303 = pneg %p302
      $region50: #{tpu_custom_call.1} parent=5 // pred_check_branch
        %305 = sbr.rel (%p303) target = $region52
      $region51: #{tpu_custom_call.1} parent=5 // pred_region
        %s306 = ssub.s32 %s12, 2
      $region52: #{tpu_custom_call.1} parent=5 // pred_fallthru
        _
    $region6: #{tpu_custom_call.1} parent=1 // loop_footer
      %s16 = sadd.s32 1, %s12
    $region7: #{tpu_custom_call.1} parent=1 // loop_footer_branch
      %11 = sbr.rel target = $region3
    $region8: #{tpu_custom_call.1} parent=1 // loop_exit
      _
    %307 = vsyncpa [#allocation3], 1
    %s308 = scalar_lea.sflag [#allocation3], 1
    %309 = vsyncpa %s308, 1
    %310 = vsyncpa [#allocation5], 1

</llo_original>
